<compile_context>
chip_gen: v6e
topology: v6e:2x2x1
jax: 0.10.0
libtpu: 0.0.40
codegen_flags: <defaults>
</compile_context>

<pallas_src>
import jax
import jax.numpy as jnp
from jax.experimental import pallas as pl
from jax.experimental.pallas import tpu as pltpu  # noqa: F401

# ----------------------------- hyper-params ---------------------------------
N_NODES = 128      # number of graph nodes
N_FEATS = 64       # dataset.num_features
N_HIDDEN = 32      # args.hidden
N_CLASSES = 16     # dataset.num_classes
K_PROP = 10        # args.K
ALPHA = 0.1        # args.alpha
# args.dropout is irrelevant at inference (training=False -> identity).


# ------------------------------ Pallas kernel --------------------------------
def appnp_kernel(x_ref, m_ref, w1t_ref, b1_ref, w2t_ref, b2_ref, o_ref):
    # Everything fits in VMEM at these sizes (~120 KiB); single grid step.
    # lin1 + relu  (bf16 operands, f32 MXU accumulation)
    x = x_ref[...].astype(jnp.bfloat16)                          # [N, F]
    h = jnp.dot(x, w1t_ref[...], preferred_element_type=jnp.float32)
    h = jnp.maximum(h + b1_ref[...], 0.0)                        # [N, H] f32

    # lin2
    z = jnp.dot(h.astype(jnp.bfloat16), w2t_ref[...],
                preferred_element_type=jnp.float32) + b2_ref[...]  # [N, C]

    # K-step APPNP propagation collapsed into one matmul with the precomputed
    # operator M (built once per graph in the prep step, stored in bf16).
    p = jnp.dot(m_ref[...], z.astype(jnp.bfloat16),
                preferred_element_type=jnp.float32)              # [N, C]

    # log_softmax over the (unpadded) class dimension.
    mx = jnp.max(p, axis=1, keepdims=True)
    s = p - mx
    lse = jnp.log(jnp.sum(jnp.exp(s), axis=1, keepdims=True))
    o_ref[...] = s - lse


# ------------------------------ JAX wrapper ----------------------------------
@jax.jit
def appnp_net_forward(x, m_op, w1t, b1, w2t, b2):
    """Hot-path forward: takes pre-prepped operands, issues one pallas_call."""
    n, f = x.shape
    hidden = w1t.shape[1]
    n_classes = w2t.shape[1]

    full = lambda shape: pl.BlockSpec(shape, lambda: (0,) * len(shape))

    # TODO(synk): for batched graphs or N >> 128, add a leading grid axis with
    # dimension_semantics=("parallel", ...) so work shards across both v7x
    # TensorCores (and fills the 256-wide v6e/v7x MXU); single-shot is the
    # right design at this toy size.
    return pl.pallas_call(
        appnp_kernel,
        out_shape=jax.ShapeDtypeStruct((n, n_classes), jnp.float32),
        grid=(),
        in_specs=[
            full((n, f)),                 # x            (f32, cast in-kernel)
            full((n, n)),                 # M            (bf16)
            full((f, hidden)),            # W1^T         (bf16)
            full((1, hidden)),            # b1           (f32)
            full((hidden, n_classes)),    # W2^T         (bf16)
            full((1, n_classes)),         # b2           (f32)
        ],
        out_specs=full((n, n_classes)),
        # No vmem_limit_bytes: ~120 KiB footprint fits the default scoped
        # limit on every generation.
    )(x, m_op, w1t, b1, w2t, b2)


# --------------------- one-time parameter / graph prep -----------------------
def prepare_params(w1, b1, w2, b2):
    """One-time parameter prep: transpose PyTorch-style (out, in) weights and
    cast to bf16; biases become f32 rows. Hoisted out of the hot path."""
    return (jnp.transpose(w1).astype(jnp.bfloat16),   # [F, H]
            b1.reshape(1, -1).astype(jnp.float32),    # [1, H]
            jnp.transpose(w2).astype(jnp.bfloat16),   # [H, C]
            b2.reshape(1, -1).astype(jnp.float32))    # [1, C]


def build_gcn_norm_adjacency(edge_index, num_nodes):
    """Dense A_hat = D^{-1/2} (A + I) D^{-1/2} from COO edge_index [2, E].
    Existing self loops are removed before adding the identity (matches PyG
    gcn_norm remove-then-add semantics)."""
    src, dst = edge_index[0], edge_index[1]
    a = jnp.zeros((num_nodes, num_nodes), jnp.float32)
    a = a.at[dst, src].set(1.0)                        # message flows src -> dst
    eye = jnp.eye(num_nodes, dtype=jnp.float32)
    a = a * (1.0 - eye) + eye                          # remove, then add self loops
    deg = jnp.sum(a, axis=1)
    dinv = jnp.where(deg > 0, 1.0 / jnp.sqrt(deg), 0.0)
    return dinv[:, None] * a * dinv[None, :]


def build_propagation_operator(a_hat, k_prop, alpha):
    """Closed-form K-step APPNP operator, built ONCE per graph in f32:
       M = (1-a)^K A^K + a * sum_{k=0}^{K-1} (1-a)^k A^k
    (obtained by running the recursion with z = I). Stored in bf16 for the
    kernel's MXU matmul."""
    n = a_hat.shape[0]
    eye = jnp.eye(n, dtype=jnp.float32)
    m = eye
    for _ in range(k_prop):
        m = (1.0 - alpha) * jnp.dot(a_hat, m) + alpha * eye
    return m.astype(jnp.bfloat16)


# ------------------------------ references -----------------------------------
def _reference_same_precision(x, m_op, w1t, b1, w2t, b2):
    """Pure-JAX reference mirroring the kernel's bf16-operand/f32-acc math."""
    h = jnp.dot(x.astype(jnp.bfloat16), w1t,
                preferred_element_type=jnp.float32) + b1
    h = jnp.maximum(h, 0.0)
    z = jnp.dot(h.astype(jnp.bfloat16), w2t,
                preferred_element_type=jnp.float32) + b2
    p = jnp.dot(m_op, z.astype(jnp.bfloat16),
                preferred_element_type=jnp.float32)
    return jax.nn.log_softmax(p, axis=1)


def _reference_f32_iterative(x, a_hat, w1, b1, w2, b2, k_prop, alpha):
    """Full-precision iterative reference (original APPNP semantics)."""
    h = jnp.maximum(x @ w1.T + b1, 0.0)
    z = h @ w2.T + b2
    p = z
    for _ in range(k_prop):
        p = (1.0 - alpha) * (a_hat @ p) + alpha * z
    return jax.nn.log_softmax(p, axis=1)


# ---------------------------------- main --------------------------------------
if __name__ == "__main__":
    key = jax.random.PRNGKey(0)
    k_x, k_e, k_w1, k_b1, k_w2, k_b2 = jax.random.split(key, 6)

    # Deterministic synthetic inputs.
    x = jax.random.normal(k_x, (N_NODES, N_FEATS), jnp.float32)

    # Random undirected edge set (duplicates are fine; A is binarized by .set).
    n_edges = 512
    src = jax.random.randint(k_e, (n_edges,), 0, N_NODES)
    dst = jax.random.randint(jax.random.fold_in(k_e, 1), (n_edges,), 0, N_NODES)
    edge_index = jnp.stack(
        [jnp.concatenate([src, dst]), jnp.concatenate([dst, src])], axis=0)

    # Deterministic parameter init (PyTorch Linear shapes: W [out, in], b [out]).
    lim1 = 1.0 / (N_FEATS ** 0.5)
    w1 = jax.random.uniform(k_w1, (N_HIDDEN, N_FEATS), jnp.float32, -lim1, lim1)
    b1 = jax.random.uniform(k_b1, (N_HIDDEN,), jnp.float32, -lim1, lim1)
    lim2 = 1.0 / (N_HIDDEN ** 0.5)
    w2 = jax.random.uniform(k_w2, (N_CLASSES, N_HIDDEN), jnp.float32, -lim2, lim2)
    b2 = jax.random.uniform(k_b2, (N_CLASSES,), jnp.float32, -lim2, lim2)

    # --- one-time prep (hoisted out of the per-call hot path) ---
    a_hat = build_gcn_norm_adjacency(edge_index, N_NODES)
    m_op = build_propagation_operator(a_hat, K_PROP, ALPHA)
    w1t, b1r, w2t, b2r = prepare_params(w1, b1, w2, b2)
    jax.block_until_ready((m_op, w1t, b1r, w2t, b2r))

    # --- hot path: single pallas_call ---
    out = appnp_net_forward(x, m_op, w1t, b1r, w2t, b2r)
    jax.block_until_ready(out)

    assert out.shape == (N_NODES, N_CLASSES)

    # log_softmax rows must sum (in prob space) to 1.
    row_sums = jnp.sum(jnp.exp(out), axis=1)
    assert bool(jnp.all(jnp.abs(row_sums - 1.0) < 1e-4))

    # Tight check against a pure-JAX reference mirroring the kernel's precision.
    ref_bf16 = _reference_same_precision(x, m_op, w1t, b1r, w2t, b2r)
    assert bool(jnp.max(jnp.abs(out - ref_bf16)) < 2e-2)

    # Loose check against the full-f32 iterative APPNP (validates the collapsed
    # K-step operator and overall bf16 numerics).
    ref_f32 = _reference_f32_iterative(x, a_hat, w1, b1, w2, b2, K_PROP, ALPHA)
    assert bool(jnp.max(jnp.abs(out - ref_f32)) < 1e-1)

    print("KERNEL_OK")
</pallas_src>

<mosaic_0001>
module attributes {stable_mosaic.version = 11 : i64} {
  func.func @appnp_kernel(%arg0: memref<128x64xf32, #tpu.memory_space<vmem>>, %arg1: memref<128x128xbf16, #tpu.memory_space<vmem>>, %arg2: memref<64x32xbf16, #tpu.memory_space<vmem>>, %arg3: memref<1x32xf32, #tpu.memory_space<vmem>>, %arg4: memref<32x16xbf16, #tpu.memory_space<vmem>>, %arg5: memref<1x16xf32, #tpu.memory_space<vmem>>, %arg6: memref<128x16xf32, #tpu.memory_space<vmem>>) attributes {dimension_semantics = [], scalar_prefetch = 0 : i64, scratch_operands = 0 : i64, tpu.core_type = #tpu.core_type<tc>} {
    %c0 = arith.constant 0 : index
    %c0_0 = arith.constant 0 : index
    %0 = vector.load %arg0[%c0, %c0_0] : memref<128x64xf32, #tpu.memory_space<vmem>>, vector<128x64xf32>
    %1 = arith.truncf %0 : vector<128x64xf32> to vector<128x64xbf16>
    %c0_1 = arith.constant 0 : index
    %c0_2 = arith.constant 0 : index
    %2 = vector.load %arg2[%c0_1, %c0_2] : memref<64x32xbf16, #tpu.memory_space<vmem>>, vector<64x32xbf16>
    %cst = arith.constant dense<0.000000e+00> : vector<128x32xf32>
    %3 = tpu.matmul %1, %2, %cst {dimension_numbers = #tpu.dot_dimension_numbers<[1], [0], [0], [1], [0, 0, 1, 1], [], []>} : vector<128x64xbf16>, vector<64x32xbf16>, vector<128x32xf32> -> vector<128x32xf32>
    %c0_3 = arith.constant 0 : index
    %c0_4 = arith.constant 0 : index
    %4 = vector.load %arg3[%c0_3, %c0_4] : memref<1x32xf32, #tpu.memory_space<vmem>>, vector<1x32xf32>
    %5 = vector.broadcast %4 : vector<1x32xf32> to vector<128x32xf32>
    %6 = arith.addf %3, %5 : vector<128x32xf32>
    %cst_5 = arith.constant 0.000000e+00 : f32
    %7 = vector.broadcast %cst_5 : f32 to vector<128x32xf32>
    %8 = arith.maximumf %6, %7 : vector<128x32xf32>
    %9 = arith.truncf %8 : vector<128x32xf32> to vector<128x32xbf16>
    %c0_6 = arith.constant 0 : index
    %c0_7 = arith.constant 0 : index
    %10 = vector.load %arg4[%c0_6, %c0_7] : memref<32x16xbf16, #tpu.memory_space<vmem>>, vector<32x16xbf16>
    %cst_8 = arith.constant dense<0.000000e+00> : vector<128x16xf32>
    %11 = tpu.matmul %9, %10, %cst_8 {dimension_numbers = #tpu.dot_dimension_numbers<[1], [0], [0], [1], [0, 0, 1, 1], [], []>} : vector<128x32xbf16>, vector<32x16xbf16>, vector<128x16xf32> -> vector<128x16xf32>
    %c0_9 = arith.constant 0 : index
    %c0_10 = arith.constant 0 : index
    %12 = vector.load %arg5[%c0_9, %c0_10] : memref<1x16xf32, #tpu.memory_space<vmem>>, vector<1x16xf32>
    %13 = vector.broadcast %12 : vector<1x16xf32> to vector<128x16xf32>
    %14 = arith.addf %11, %13 : vector<128x16xf32>
    %c0_11 = arith.constant 0 : index
    %c0_12 = arith.constant 0 : index
    %15 = vector.load %arg1[%c0_11, %c0_12] : memref<128x128xbf16, #tpu.memory_space<vmem>>, vector<128x128xbf16>
    %16 = arith.truncf %14 : vector<128x16xf32> to vector<128x16xbf16>
    %cst_13 = arith.constant dense<0.000000e+00> : vector<128x16xf32>
    %17 = tpu.matmul %15, %16, %cst_13 {dimension_numbers = #tpu.dot_dimension_numbers<[1], [0], [0], [1], [0, 0, 1, 1], [], []>} : vector<128x128xbf16>, vector<128x16xbf16>, vector<128x16xf32> -> vector<128x16xf32>
    %cst_14 = arith.constant dense<0xFF800000> : vector<128xf32>
    %18 = vector.multi_reduction <maximumf>, %17, %cst_14 [1] : vector<128x16xf32> to vector<128xf32>
    %19 = vector.shape_cast %18 : vector<128xf32> to vector<128x1xf32>
    %20 = vector.broadcast %19 : vector<128x1xf32> to vector<128x16xf32>
    %21 = arith.subf %17, %20 : vector<128x16xf32>
    %22 = math.exp %21 : vector<128x16xf32>
    %cst_15 = arith.constant dense<0.000000e+00> : vector<128xf32>
    %23 = vector.multi_reduction <add>, %22, %cst_15 [1] : vector<128x16xf32> to vector<128xf32>
    %24 = vector.shape_cast %23 : vector<128xf32> to vector<128x1xf32>
    %25 = math.log %24 : vector<128x1xf32>
    %26 = vector.broadcast %25 : vector<128x1xf32> to vector<128x16xf32>
    %27 = arith.subf %21, %26 : vector<128x16xf32>
    %c0_16 = arith.constant 0 : index
    %c0_17 = arith.constant 0 : index
    %28 = vector.load %arg6[%c0_16, %c0_17] : memref<128x16xf32, #tpu.memory_space<vmem>>, vector<128x16xf32>
    tpu.vector_store %arg6[%c0_16, %c0_17], %27 {strides = array<i32>} : memref<128x16xf32, #tpu.memory_space<vmem>>, vector<128x16xf32>,
    return
  }
}

</mosaic_0001>

<llo_original>
// kernel: appnp_net_forward.1
$region0: #{appnp_net_forward.1}
  #allocation0 [shape = 'u32[]', space=smem, size = 0x4, offset = 0x4, fixed_abs, tag = 'smem constant byte address 0x4 - core index']
  #allocation1 [shape = 'u32[144,128]{1,0:T(1,128)}', space=vmem, size = 0x12000, scoped, tag = 'internal scratch']
  %s0 = inlined_call_operand.vmem [shape: f32[128,64], index: 0, kind: input, shape index: {}]
  %s1 = inlined_call_operand.vmem [shape: bf16[128,128], index: 1, kind: input, shape index: {}]
  %s2 = inlined_call_operand.vmem [shape: bf16[64,32], index: 2, kind: input, shape index: {}]
  %s3 = inlined_call_operand.vmem [shape: f32[1,32], index: 3, kind: input, shape index: {}]
  %s4 = inlined_call_operand.vmem [shape: bf16[32,16], index: 4, kind: input, shape index: {}]
  %s5 = inlined_call_operand.vmem [shape: f32[1,16], index: 5, kind: input, shape index: {}]
  %s6 = inlined_call_operand.vmem [shape: f32[128,16], index: 6, kind: output, shape index: {}]
  %s7 = sld [smem:[#allocation0]]
  $region34: #{appnp_net_forward.1} parent=0
    _
  %s9 = ssub.s32 1, %s7
  %s10 = scalar_select 0, %s9, %s7
  // Predicated region
  $region2: #{appnp_net_forward.1} parent=0 // pred_check
    _
  $region3: #{appnp_net_forward.1} parent=0 // pred_check_branch
    %12 = sbr.rel (0) target = $region5
  $region4: #{appnp_net_forward.1} parent=0 // pred_region
    _
  $region5: #{appnp_net_forward.1} parent=0 // pred_fallthru
    _
  // Predicated region
  $region6: #{appnp_net_forward.1} parent=0 // pred_check
    _
  $region7: #{appnp_net_forward.1} parent=0 // pred_check_branch
    %14 = sbr.rel (0) target = $region9
  $region8: #{appnp_net_forward.1} parent=0 // pred_region
    _
  $region9: #{appnp_net_forward.1} parent=0 // pred_fallthru
    _
  // Predicated region
  $region10: #{appnp_net_forward.1} parent=0 // pred_check
    _
  $region11: #{appnp_net_forward.1} parent=0 // pred_check_branch
    %16 = sbr.rel (0) target = $region13
  $region12: #{appnp_net_forward.1} parent=0 // pred_region
    _
  $region13: #{appnp_net_forward.1} parent=0 // pred_fallthru
    _
  // Predicated region
  $region14: #{appnp_net_forward.1} parent=0 // pred_check
    _
  $region15: #{appnp_net_forward.1} parent=0 // pred_check_branch
    %18 = sbr.rel (0) target = $region17
  $region16: #{appnp_net_forward.1} parent=0 // pred_region
    _
  $region17: #{appnp_net_forward.1} parent=0 // pred_fallthru
    _
  // Predicated region
  $region18: #{appnp_net_forward.1} parent=0 // pred_check
    _
  $region19: #{appnp_net_forward.1} parent=0 // pred_check_branch
    %20 = sbr.rel (0) target = $region21
  $region20: #{appnp_net_forward.1} parent=0 // pred_region
    _
  $region21: #{appnp_net_forward.1} parent=0 // pred_fallthru
    _
  // Predicated region
  $region22: #{appnp_net_forward.1} parent=0 // pred_check
    _
  $region23: #{appnp_net_forward.1} parent=0 // pred_check_branch
    %22 = sbr.rel (0) target = $region25
  $region24: #{appnp_net_forward.1} parent=0 // pred_region
    _
  $region25: #{appnp_net_forward.1} parent=0 // pred_fallthru
    _
  %v24 = vld [vmem:[%s0] sm:$0xff]
  %v25 = vld [vmem:[%s0 + $0x8] sm:$0xff]
  %v26 = vld [vmem:[%s0 + $0x10] sm:$0xff]
  %v27 = vld [vmem:[%s0 + $0x18] sm:$0xff]
  %v28 = vld [vmem:[%s0 + $0x20] sm:$0xff]
  %v29 = vld [vmem:[%s0 + $0x28] sm:$0xff]
  %v30 = vld [vmem:[%s0 + $0x30] sm:$0xff]
  %v31 = vld [vmem:[%s0 + $0x38] sm:$0xff]
  %v32 = vld [vmem:[%s0 + $0x40] sm:$0xff]
  %v33 = vld [vmem:[%s0 + $0x48] sm:$0xff]
  %v34 = vld [vmem:[%s0 + $0x50] sm:$0xff]
  %v35 = vld [vmem:[%s0 + $0x58] sm:$0xff]
  %v36 = vld [vmem:[%s0 + $0x60] sm:$0xff]
  %v37 = vld [vmem:[%s0 + $0x68] sm:$0xff]
  %v38 = vld [vmem:[%s0 + $0x70] sm:$0xff]
  %v39 = vld [vmem:[%s0 + $0x78] sm:$0xff]
  %v40 = vpack.c.bf16 %v25, %v24
  %v41 = vpack.c.bf16 %v27, %v26
  %v42 = vpack.c.bf16 %v29, %v28
  %v43 = vpack.c.bf16 %v31, %v30
  %v44 = vpack.c.bf16 %v33, %v32
  %v45 = vpack.c.bf16 %v35, %v34
  %v46 = vpack.c.bf16 %v37, %v36
  %v47 = vpack.c.bf16 %v39, %v38
  %v48 = vld [vmem:[%s2] sm:$0xf]
  %v49 = vld [vmem:[%s2 + $0x4] sm:$0xf]
  %v50 = vld [vmem:[%s2 + $0x8] sm:$0xf]
  %v51 = vld [vmem:[%s2 + $0xc] sm:$0xf]
  %v52 = vld [vmem:[%s2 + $0x10] sm:$0xf]
  %v53 = vld [vmem:[%s2 + $0x14] sm:$0xf]
  %v54 = vld [vmem:[%s2 + $0x18] sm:$0xf]
  %v55 = vld [vmem:[%s2 + $0x1c] sm:$0xf]
  %v56 = vld [vmem:[%s3] sm:$0x1]
  %v58 = vlaneseq
  %v59 = vshrl.u32 %v58, 7
  %v60 = vsub.s32 0, %v59
  %v61 = vrot.slane %v56, %v60
  %v71 = vunpack.c.l.b16 %v48
  %v72 = vunpack.c.l.b16 %v49
  %v73 = vunpack.c.l.b16 %v50
  %v74 = vunpack.c.l.b16 %v51
  %v75 = vunpack.c.l.b16 %v52
  %v76 = vunpack.c.l.b16 %v53
  %v77 = vunpack.c.l.b16 %v54
  %v78 = vunpack.c.l.b16 %v55
  %v79 = vpack.c.b16 %v72, %v71
  %v80 = vpack.c.b16 %v74, %v73
  %v81 = vpack.c.b16 %v76, %v75
  %v82 = vpack.c.b16 %v78, %v77
  %vm87 = vcmask 523264
  %v89 = vsel %vm87, %v40, 0
  %v92 = vsel %vm87, %v41, 0
  %v95 = vsel %vm87, %v42, 0
  %v98 = vsel %vm87, %v43, 0
  %v101 = vsel %vm87, %v44, 0
  %v104 = vsel %vm87, %v45, 0
  %v107 = vsel %vm87, %v46, 0
  %v110 = vsel %vm87, %v47, 0
  %112 = vmatprep.subr.bf16.mxu0 0
  %113 = vmatpush1.bf16.msra.mxu0 0
  %114 = vmatprep.subr.bf16.mxu0 0
  %115 = vmatpush1.bf16.msra.mxu0 0
  %116 = vmatprep.subr.bf16.mxu0 0
  %117 = vmatpush1.bf16.msra.mxu0 0
  %118 = vmatprep.subr.bf16.mxu0 0
  %119 = vmatpush1.bf16.msra.mxu0 0
  %120 = vmatprep.subr.bf16.mxu0 0
  %121 = vmatpush1.bf16.msra.mxu0 %v82
  %122 = vmatprep.subr.bf16.mxu0 0
  %123 = vmatpush1.bf16.msra.mxu0 %v81
  %124 = vmatprep.subr.bf16.mxu0 0
  %125 = vmatpush1.bf16.msra.mxu0 %v80
  %126 = vmatprep.subr.bf16.mxu0 0
  %127 = vmatpush1.bf16.msra.mxu0 %v79
  %128 = vmatprep.subr.bf16.mxu0 0
  %129 = vmatpush2.bf16.msra.mxu0 0
  %130 = vmatprep.subr.bf16.mxu0 0
  %131 = vmatpush2.bf16.msra.mxu0 0
  %132 = vmatprep.subr.bf16.mxu0 0
  %133 = vmatpush2.bf16.msra.mxu0 0
  %134 = vmatprep.subr.bf16.mxu0 0
  %135 = vmatpush2.bf16.msra.mxu0 0
  %136 = vmatprep.subr.bf16.mxu0 0
  %137 = vmatpush2.bf16.msra.mxu0 0
  %138 = vmatprep.subr.bf16.mxu0 0
  %139 = vmatpush2.bf16.msra.mxu0 0
  %140 = vmatprep.subr.bf16.mxu0 0
  %141 = vmatpush2.bf16.msra.mxu0 0
  %142 = vmatprep.subr.bf16.mxu0 0
  %143 = vmatpush2.bf16.msra.mxu0 0
  %144 = vmatprep.mubr.bf16.mxu0 0
  %145 = vmatmul.mubr.bf16.gmra.mxu0 %v89
  %v146 = vpop.f32.mrf.mxu0
  %v147 = vadd.f32 %v61, %v146
  %v148 = vpop.f32.mrf.mxu0
  %v149 = vpop.f32.mrf.mxu0
  %v150 = vadd.f32 %v61, %v149
  %v151 = vpop.f32.mrf.mxu0
  %152 = vmatprep.mubr.bf16.mxu0 0
  %153 = vmatmul.mubr.bf16.gmra.mxu0 %v92
  %v154 = vpop.f32.mrf.mxu0
  %v155 = vadd.f32 %v61, %v154
  %v156 = vpop.f32.mrf.mxu0
  %v157 = vpop.f32.mrf.mxu0
  %v158 = vadd.f32 %v61, %v157
  %v159 = vpop.f32.mrf.mxu0
  %160 = vmatprep.mubr.bf16.mxu0 0
  %161 = vmatmul.mubr.bf16.gmra.mxu0 %v95
  %v162 = vpop.f32.mrf.mxu0
  %v163 = vadd.f32 %v61, %v162
  %v164 = vpop.f32.mrf.mxu0
  %v165 = vpop.f32.mrf.mxu0
  %v166 = vadd.f32 %v61, %v165
  %v167 = vpop.f32.mrf.mxu0
  %168 = vmatprep.mubr.bf16.mxu0 0
  %169 = vmatmul.mubr.bf16.gmra.mxu0 %v98
  %v170 = vpop.f32.mrf.mxu0
  %v171 = vadd.f32 %v61, %v170
  %v172 = vpop.f32.mrf.mxu0
  %v173 = vpop.f32.mrf.mxu0
  %v174 = vadd.f32 %v61, %v173
  %v175 = vpop.f32.mrf.mxu0
  %176 = vmatprep.mubr.bf16.mxu0 0
  %177 = vmatmul.mubr.bf16.gmra.mxu0 %v101
  %v178 = vpop.f32.mrf.mxu0
  %v179 = vadd.f32 %v61, %v178
  %v180 = vpop.f32.mrf.mxu0
  %v181 = vpop.f32.mrf.mxu0
  %v182 = vadd.f32 %v61, %v181
  %v183 = vpop.f32.mrf.mxu0
  %184 = vmatprep.mubr.bf16.mxu0 0
  %185 = vmatmul.mubr.bf16.gmra.mxu0 %v104
  %v186 = vpop.f32.mrf.mxu0
  %v187 = vadd.f32 %v61, %v186
  %v188 = vpop.f32.mrf.mxu0
  %v189 = vpop.f32.mrf.mxu0
  %v190 = vadd.f32 %v61, %v189
  %v191 = vpop.f32.mrf.mxu0
  %192 = vmatprep.mubr.bf16.mxu0 0
  %193 = vmatmul.mubr.bf16.gmra.mxu0 %v107
  %v194 = vpop.f32.mrf.mxu0
  %v195 = vadd.f32 %v61, %v194
  %v196 = vpop.f32.mrf.mxu0
  %v197 = vpop.f32.mrf.mxu0
  %v198 = vadd.f32 %v61, %v197
  %v199 = vpop.f32.mrf.mxu0
  %200 = vmatprep.mubr.bf16.mxu0 0
  %201 = vmatmul.mubr.bf16.gmra.mxu0 %v110
  %v202 = vpop.f32.mrf.mxu0
  %v203 = vadd.f32 %v61, %v202
  %v204 = vpop.f32.mrf.mxu0
  %v205 = vpop.f32.mrf.mxu0
  %v206 = vadd.f32 %v61, %v205
  %v207 = vpop.f32.mrf.mxu0
  %208 = vdwg.mxu0
  %v209 = vmax.f32 %v147, 0.0
  %v210 = vmax.f32 %v150, 0.0
  %v211 = vmax.f32 %v155, 0.0
  %v212 = vmax.f32 %v158, 0.0
  %v213 = vmax.f32 %v163, 0.0
  %v214 = vmax.f32 %v166, 0.0
  %v215 = vmax.f32 %v171, 0.0
  %v216 = vmax.f32 %v174, 0.0
  %v217 = vmax.f32 %v179, 0.0
  %v218 = vmax.f32 %v182, 0.0
  %v219 = vmax.f32 %v187, 0.0
  %v220 = vmax.f32 %v190, 0.0
  %v221 = vmax.f32 %v195, 0.0
  %v222 = vmax.f32 %v198, 0.0
  %v223 = vmax.f32 %v203, 0.0
  %v224 = vmax.f32 %v206, 0.0
  %v225 = vpack.c.bf16 %v210, %v209
  %v226 = vpack.c.bf16 %v212, %v211
  %v227 = vpack.c.bf16 %v214, %v213
  %v228 = vpack.c.bf16 %v216, %v215
  %v229 = vpack.c.bf16 %v218, %v217
  %v230 = vpack.c.bf16 %v220, %v219
  %v231 = vpack.c.bf16 %v222, %v221
  %v232 = vpack.c.bf16 %v224, %v223
  %v233 = vld [vmem:[%s4] sm:$0xf]
  %v234 = vld [vmem:[%s4 + $0x4] sm:$0xf]
  %v235 = vld [vmem:[%s4 + $0x8] sm:$0xf]
  %v236 = vld [vmem:[%s4 + $0xc] sm:$0xf]
  %v237 = vld [vmem:[%s5] sm:$0x1]
  %v239 = vlaneseq
  %v240 = vshrl.u32 %v239, 7
  %v241 = vsub.s32 0, %v240
  %v242 = vrot.slane %v237, %v241
  %v248 = vunpack.c.l.b16 %v233
  %v249 = vunpack.c.l.b16 %v234
  %v250 = vunpack.c.l.b16 %v235
  %v251 = vunpack.c.l.b16 %v236
  %v252 = vpack.c.b16 %v249, %v248
  %v253 = vpack.c.b16 %v251, %v250
  %vm256 = vcmask 261120
  %v258 = vsel %vm256, %v225, 0
  %v261 = vsel %vm256, %v226, 0
  %v264 = vsel %vm256, %v227, 0
  %v267 = vsel %vm256, %v228, 0
  %v270 = vsel %vm256, %v229, 0
  %v273 = vsel %vm256, %v230, 0
  %v276 = vsel %vm256, %v231, 0
  %v279 = vsel %vm256, %v232, 0
  %281 = vmatprep.subr.bf16.mxu0 0
  %282 = vmatpush1.bf16.msra.mxu0 0
  %283 = vmatprep.subr.bf16.mxu0 0
  %284 = vmatpush1.bf16.msra.mxu0 0
  %285 = vmatprep.subr.bf16.mxu0 0
  %286 = vmatpush1.bf16.msra.mxu0 0
  %287 = vmatprep.subr.bf16.mxu0 0
  %288 = vmatpush1.bf16.msra.mxu0 0
  %289 = vmatprep.subr.bf16.mxu0 0
  %290 = vmatpush1.bf16.msra.mxu0 0
  %291 = vmatprep.subr.bf16.mxu0 0
  %292 = vmatpush1.bf16.msra.mxu0 0
  %293 = vmatprep.subr.bf16.mxu0 0
  %294 = vmatpush1.bf16.msra.mxu0 %v253
  %295 = vmatprep.subr.bf16.mxu0 0
  %296 = vmatpush1.bf16.msra.mxu0 %v252
  %297 = vmatprep.subr.bf16.mxu0 0
  %298 = vmatpush2.bf16.msra.mxu0 0
  %299 = vmatprep.subr.bf16.mxu0 0
  %300 = vmatpush2.bf16.msra.mxu0 0
  %301 = vmatprep.subr.bf16.mxu0 0
  %302 = vmatpush2.bf16.msra.mxu0 0
  %303 = vmatprep.subr.bf16.mxu0 0
  %304 = vmatpush2.bf16.msra.mxu0 0
  %305 = vmatprep.subr.bf16.mxu0 0
  %306 = vmatpush2.bf16.msra.mxu0 0
  %307 = vmatprep.subr.bf16.mxu0 0
  %308 = vmatpush2.bf16.msra.mxu0 0
  %309 = vmatprep.subr.bf16.mxu0 0
  %310 = vmatpush2.bf16.msra.mxu0 0
  %311 = vmatprep.subr.bf16.mxu0 0
  %312 = vmatpush2.bf16.msra.mxu0 0
  %313 = vmatprep.mubr.bf16.mxu0 0
  %314 = vmatmul.mubr.bf16.gmra.mxu0 %v258
  %v315 = vpop.f32.mrf.mxu0
  %v316 = vadd.f32 %v242, %v315
  %v317 = vpop.f32.mrf.mxu0
  %v318 = vpop.f32.mrf.mxu0
  %v319 = vadd.f32 %v242, %v318
  %v320 = vpop.f32.mrf.mxu0
  %321 = vmatprep.mubr.bf16.mxu0 0
  %322 = vmatmul.mubr.bf16.gmra.mxu0 %v261
  %v323 = vpop.f32.mrf.mxu0
  %v324 = vadd.f32 %v242, %v323
  %v325 = vpop.f32.mrf.mxu0
  %v326 = vpop.f32.mrf.mxu0
  %v327 = vadd.f32 %v242, %v326
  %v328 = vpop.f32.mrf.mxu0
  %329 = vmatprep.mubr.bf16.mxu0 0
  %330 = vmatmul.mubr.bf16.gmra.mxu0 %v264
  %v331 = vpop.f32.mrf.mxu0
  %v332 = vadd.f32 %v242, %v331
  %v333 = vpop.f32.mrf.mxu0
  %v334 = vpop.f32.mrf.mxu0
  %v335 = vadd.f32 %v242, %v334
  %v336 = vpop.f32.mrf.mxu0
  %337 = vmatprep.mubr.bf16.mxu0 0
  %338 = vmatmul.mubr.bf16.gmra.mxu0 %v267
  %v339 = vpop.f32.mrf.mxu0
  %v340 = vadd.f32 %v242, %v339
  %v341 = vpop.f32.mrf.mxu0
  %v342 = vpop.f32.mrf.mxu0
  %v343 = vadd.f32 %v242, %v342
  %v344 = vpop.f32.mrf.mxu0
  %345 = vmatprep.mubr.bf16.mxu0 0
  %346 = vmatmul.mubr.bf16.gmra.mxu0 %v270
  %v347 = vpop.f32.mrf.mxu0
  %v348 = vadd.f32 %v242, %v347
  %v349 = vpop.f32.mrf.mxu0
  %v350 = vpop.f32.mrf.mxu0
  %v351 = vadd.f32 %v242, %v350
  %v352 = vpop.f32.mrf.mxu0
  %353 = vmatprep.mubr.bf16.mxu0 0
  %354 = vmatmul.mubr.bf16.gmra.mxu0 %v273
  %v355 = vpop.f32.mrf.mxu0
  %v356 = vadd.f32 %v242, %v355
  %v357 = vpop.f32.mrf.mxu0
  %v358 = vpop.f32.mrf.mxu0
  %v359 = vadd.f32 %v242, %v358
  %v360 = vpop.f32.mrf.mxu0
  %361 = vmatprep.mubr.bf16.mxu0 0
  %362 = vmatmul.mubr.bf16.gmra.mxu0 %v276
  %v363 = vpop.f32.mrf.mxu0
  %v364 = vadd.f32 %v242, %v363
  %v365 = vpop.f32.mrf.mxu0
  %v366 = vpop.f32.mrf.mxu0
  %v367 = vadd.f32 %v242, %v366
  %v368 = vpop.f32.mrf.mxu0
  %369 = vmatprep.mubr.bf16.mxu0 0
  %370 = vmatmul.mubr.bf16.gmra.mxu0 %v279
  %v371 = vpop.f32.mrf.mxu0
  %v372 = vadd.f32 %v242, %v371
  %v373 = vpop.f32.mrf.mxu0
  %v374 = vpop.f32.mrf.mxu0
  %v375 = vadd.f32 %v242, %v374
  %v376 = vpop.f32.mrf.mxu0
  %377 = vdwg.mxu0
  %v378 = vld [vmem:[%s1] sm:$0xf]
  %v379 = vld [vmem:[%s1 + $0x4] sm:$0xf]
  %v380 = vld [vmem:[%s1 + $0x8] sm:$0xf]
  %v381 = vld [vmem:[%s1 + $0xc] sm:$0xf]
  %v382 = vld [vmem:[%s1 + $0x10] sm:$0xf]
  %v383 = vld [vmem:[%s1 + $0x14] sm:$0xf]
  %v384 = vld [vmem:[%s1 + $0x18] sm:$0xf]
  %v385 = vld [vmem:[%s1 + $0x1c] sm:$0xf]
  %v386 = vld [vmem:[%s1 + $0x20] sm:$0xf]
  %v387 = vld [vmem:[%s1 + $0x24] sm:$0xf]
  %v388 = vld [vmem:[%s1 + $0x28] sm:$0xf]
  %v389 = vld [vmem:[%s1 + $0x2c] sm:$0xf]
  %v390 = vld [vmem:[%s1 + $0x30] sm:$0xf]
  %v391 = vld [vmem:[%s1 + $0x34] sm:$0xf]
  %v392 = vld [vmem:[%s1 + $0x38] sm:$0xf]
  %v393 = vld [vmem:[%s1 + $0x3c] sm:$0xf]
  %v394 = vpack.c.bf16 %v319, %v316
  %v395 = vpack.c.bf16 %v327, %v324
  %v396 = vpack.c.bf16 %v335, %v332
  %v397 = vpack.c.bf16 %v343, %v340
  %v398 = vpack.c.bf16 %v351, %v348
  %v399 = vpack.c.bf16 %v359, %v356
  %v400 = vpack.c.bf16 %v367, %v364
  %v401 = vpack.c.bf16 %v375, %v372
  %v418 = vunpack.c.l.b16 %v378
  %v419 = vunpack.c.l.b16 %v379
  %v420 = vunpack.c.l.b16 %v380
  %v421 = vunpack.c.l.b16 %v381
  %v422 = vunpack.c.l.b16 %v382
  %v423 = vunpack.c.l.b16 %v383
  %v424 = vunpack.c.l.b16 %v384
  %v425 = vunpack.c.l.b16 %v385
  %v426 = vunpack.c.l.b16 %v386
  %v427 = vunpack.c.l.b16 %v387
  %v428 = vunpack.c.l.b16 %v388
  %v429 = vunpack.c.l.b16 %v389
  %v430 = vunpack.c.l.b16 %v390
  %v431 = vunpack.c.l.b16 %v391
  %v432 = vunpack.c.l.b16 %v392
  %v433 = vunpack.c.l.b16 %v393
  %v434 = vpack.c.b16 %v419, %v418
  %v435 = vpack.c.b16 %v421, %v420
  %v436 = vpack.c.b16 %v423, %v422
  %v437 = vpack.c.b16 %v425, %v424
  %v438 = vpack.c.b16 %v427, %v426
  %v439 = vpack.c.b16 %v429, %v428
  %v440 = vpack.c.b16 %v431, %v430
  %v441 = vpack.c.b16 %v433, %v432
  %450 = vmatprep.subr.bf16.mxu0 0
  %451 = vmatpush1.bf16.msra.mxu0 %v401
  %452 = vmatprep.subr.bf16.mxu0 0
  %453 = vmatpush1.bf16.msra.mxu0 %v400
  %454 = vmatprep.subr.bf16.mxu0 0
  %455 = vmatpush1.bf16.msra.mxu0 %v399
  %456 = vmatprep.subr.bf16.mxu0 0
  %457 = vmatpush1.bf16.msra.mxu0 %v398
  %458 = vmatprep.subr.bf16.mxu0 0
  %459 = vmatpush1.bf16.msra.mxu0 %v397
  %460 = vmatprep.subr.bf16.mxu0 0
  %461 = vmatpush1.bf16.msra.mxu0 %v396
  %462 = vmatprep.subr.bf16.mxu0 0
  %463 = vmatpush1.bf16.msra.mxu0 %v395
  %464 = vmatprep.subr.bf16.mxu0 0
  %465 = vmatpush1.bf16.msra.mxu0 %v394
  %466 = vmatprep.subr.bf16.mxu0 0
  %467 = vmatpush2.bf16.msra.mxu0 0
  %468 = vmatprep.subr.bf16.mxu0 0
  %469 = vmatpush2.bf16.msra.mxu0 0
  %470 = vmatprep.subr.bf16.mxu0 0
  %471 = vmatpush2.bf16.msra.mxu0 0
  %472 = vmatprep.subr.bf16.mxu0 0
  %473 = vmatpush2.bf16.msra.mxu0 0
  %474 = vmatprep.subr.bf16.mxu0 0
  %475 = vmatpush2.bf16.msra.mxu0 0
  %476 = vmatprep.subr.bf16.mxu0 0
  %477 = vmatpush2.bf16.msra.mxu0 0
  %478 = vmatprep.subr.bf16.mxu0 0
  %479 = vmatpush2.bf16.msra.mxu0 0
  %480 = vmatprep.subr.bf16.mxu0 0
  %481 = vmatpush2.bf16.msra.mxu0 0
  %482 = vmatprep.mubr.bf16.mxu0 0
  %483 = vmatmul.mubr.bf16.gmra.mxu0 %v434
  %v484 = vpop.f32.mrf.mxu0
  %v485 = vadd.f32 0.0, %v484
  %v486 = vpop.f32.mrf.mxu0
  %v487 = vpop.f32.mrf.mxu0
  %v488 = vadd.f32 0.0, %v487
  %v489 = vpop.f32.mrf.mxu0
  %490 = vmatprep.mubr.bf16.mxu0 0
  %491 = vmatmul.mubr.bf16.gmra.mxu0 %v435
  %v492 = vpop.f32.mrf.mxu0
  %v493 = vadd.f32 0.0, %v492
  %v494 = vpop.f32.mrf.mxu0
  %v495 = vpop.f32.mrf.mxu0
  %v496 = vadd.f32 0.0, %v495
  %v497 = vpop.f32.mrf.mxu0
  %498 = vmatprep.mubr.bf16.mxu0 0
  %499 = vmatmul.mubr.bf16.gmra.mxu0 %v436
  %v500 = vpop.f32.mrf.mxu0
  %v501 = vadd.f32 0.0, %v500
  %v502 = vpop.f32.mrf.mxu0
  %v503 = vpop.f32.mrf.mxu0
  %v504 = vadd.f32 0.0, %v503
  %v505 = vpop.f32.mrf.mxu0
  %506 = vmatprep.mubr.bf16.mxu0 0
  %507 = vmatmul.mubr.bf16.gmra.mxu0 %v437
  %v508 = vpop.f32.mrf.mxu0
  %v509 = vadd.f32 0.0, %v508
  %v510 = vpop.f32.mrf.mxu0
  %v511 = vpop.f32.mrf.mxu0
  %v512 = vadd.f32 0.0, %v511
  %v513 = vpop.f32.mrf.mxu0
  %514 = vmatprep.mubr.bf16.mxu0 0
  %515 = vmatmul.mubr.bf16.gmra.mxu0 %v438
  %v516 = vpop.f32.mrf.mxu0
  %v517 = vadd.f32 0.0, %v516
  %v518 = vpop.f32.mrf.mxu0
  %v519 = vpop.f32.mrf.mxu0
  %v520 = vadd.f32 0.0, %v519
  %v521 = vpop.f32.mrf.mxu0
  %522 = vmatprep.mubr.bf16.mxu0 0
  %523 = vmatmul.mubr.bf16.gmra.mxu0 %v439
  %v524 = vpop.f32.mrf.mxu0
  %v525 = vadd.f32 0.0, %v524
  %v526 = vpop.f32.mrf.mxu0
  %v527 = vpop.f32.mrf.mxu0
  %v528 = vadd.f32 0.0, %v527
  %v529 = vpop.f32.mrf.mxu0
  %530 = vmatprep.mubr.bf16.mxu0 0
  %531 = vmatmul.mubr.bf16.gmra.mxu0 %v440
  %v532 = vpop.f32.mrf.mxu0
  %v533 = vadd.f32 0.0, %v532
  %v534 = vpop.f32.mrf.mxu0
  %v535 = vpop.f32.mrf.mxu0
  %v536 = vadd.f32 0.0, %v535
  %v537 = vpop.f32.mrf.mxu0
  %538 = vmatprep.mubr.bf16.mxu0 0
  %539 = vmatmul.mubr.bf16.gmra.mxu0 %v441
  %v540 = vpop.f32.mrf.mxu0
  %v541 = vadd.f32 0.0, %v540
  %v542 = vpop.f32.mrf.mxu0
  %v543 = vpop.f32.mrf.mxu0
  %v544 = vadd.f32 0.0, %v543
  %v545 = vpop.f32.mrf.mxu0
  %546 = vdwg.mxu0
  %vm547 = vcmask 130048
  %v548 = vsel %vm547, %v485, -inf
  %549 = vmax.xlane.f32.xlu0 %v548
  %v550 = vpop.xlane.xlu0 %549
  %v551 = vsel %vm547, %v488, -inf
  %552 = vmax.xlane.f32.xlu0 %v551
  %v553 = vpop.xlane.xlu0 %552
  %v554 = vsel %vm547, %v493, -inf
  %555 = vmax.xlane.f32.xlu0 %v554
  %v556 = vpop.xlane.xlu0 %555
  %v557 = vsel %vm547, %v496, -inf
  %558 = vmax.xlane.f32.xlu0 %v557
  %v559 = vpop.xlane.xlu0 %558
  %v560 = vsel %vm547, %v501, -inf
  %561 = vmax.xlane.f32.xlu0 %v560
  %v562 = vpop.xlane.xlu0 %561
  %v563 = vsel %vm547, %v504, -inf
  %564 = vmax.xlane.f32.xlu0 %v563
  %v565 = vpop.xlane.xlu0 %564
  %v566 = vsel %vm547, %v509, -inf
  %567 = vmax.xlane.f32.xlu0 %v566
  %v568 = vpop.xlane.xlu0 %567
  %v569 = vsel %vm547, %v512, -inf
  %570 = vmax.xlane.f32.xlu0 %v569
  %v571 = vpop.xlane.xlu0 %570
  %v572 = vsel %vm547, %v517, -inf
  %573 = vmax.xlane.f32.xlu0 %v572
  %v574 = vpop.xlane.xlu0 %573
  %v575 = vsel %vm547, %v520, -inf
  %576 = vmax.xlane.f32.xlu0 %v575
  %v577 = vpop.xlane.xlu0 %576
  %v578 = vsel %vm547, %v525, -inf
  %579 = vmax.xlane.f32.xlu0 %v578
  %v580 = vpop.xlane.xlu0 %579
  %v581 = vsel %vm547, %v528, -inf
  %582 = vmax.xlane.f32.xlu0 %v581
  %v583 = vpop.xlane.xlu0 %582
  %v584 = vsel %vm547, %v533, -inf
  %585 = vmax.xlane.f32.xlu0 %v584
  %v586 = vpop.xlane.xlu0 %585
  %v587 = vsel %vm547, %v536, -inf
  %588 = vmax.xlane.f32.xlu0 %v587
  %v589 = vpop.xlane.xlu0 %588
  %v590 = vsel %vm547, %v541, -inf
  %591 = vmax.xlane.f32.xlu0 %v590
  %v592 = vpop.xlane.xlu0 %591
  %v593 = vsel %vm547, %v544, -inf
  %594 = vmax.xlane.f32.xlu0 %v593
  %v595 = vpop.xlane.xlu0 %594
  %v596 = vsub.f32 %v485, %v550
  %v597 = vsub.f32 %v488, %v553
  %v598 = vsub.f32 %v493, %v556
  %v599 = vsub.f32 %v496, %v559
  %v600 = vsub.f32 %v501, %v562
  %v601 = vsub.f32 %v504, %v565
  %v602 = vsub.f32 %v509, %v568
  %v603 = vsub.f32 %v512, %v571
  %v604 = vsub.f32 %v517, %v574
  %v605 = vsub.f32 %v520, %v577
  %v606 = vsub.f32 %v525, %v580
  %v607 = vsub.f32 %v528, %v583
  %v608 = vsub.f32 %v533, %v586
  %v609 = vsub.f32 %v536, %v589
  %v610 = vsub.f32 %v541, %v592
  %v611 = vsub.f32 %v544, %v595
  %v612 = vmul.f32 %v596, 1.442695
  %v613 = vpow.pop %v612
  %v614 = vmul.f32 %v597, 1.442695
  %v615 = vpow.pop %v614
  %v616 = vmul.f32 %v598, 1.442695
  %v617 = vpow.pop %v616
  %v618 = vmul.f32 %v599, 1.442695
  %v619 = vpow.pop %v618
  %v620 = vmul.f32 %v600, 1.442695
  %v621 = vpow.pop %v620
  %v622 = vmul.f32 %v601, 1.442695
  %v623 = vpow.pop %v622
  %v624 = vmul.f32 %v602, 1.442695
  %v625 = vpow.pop %v624
  %v626 = vmul.f32 %v603, 1.442695
  %v627 = vpow.pop %v626
  %v628 = vmul.f32 %v604, 1.442695
  %v629 = vpow.pop %v628
  %v630 = vmul.f32 %v605, 1.442695
  %v631 = vpow.pop %v630
  %v632 = vmul.f32 %v606, 1.442695
  %v633 = vpow.pop %v632
  %v634 = vmul.f32 %v607, 1.442695
  %v635 = vpow.pop %v634
  %v636 = vmul.f32 %v608, 1.442695
  %v637 = vpow.pop %v636
  %v638 = vmul.f32 %v609, 1.442695
  %v639 = vpow.pop %v638
  %v640 = vmul.f32 %v610, 1.442695
  %v641 = vpow.pop %v640
  %v642 = vmul.f32 %v611, 1.442695
  %v643 = vpow.pop %v642
  %v644 = vsel %vm547, %v613, 0.0
  %645 = vadd.xlane.f32.xlu0 %v644
  %v646 = vpop.xlane.xlu0 %645
  %v647 = vsel %vm547, %v615, 0.0
  %648 = vadd.xlane.f32.xlu0 %v647
  %v649 = vpop.xlane.xlu0 %648
  %v650 = vsel %vm547, %v617, 0.0
  %651 = vadd.xlane.f32.xlu0 %v650
  %v652 = vpop.xlane.xlu0 %651
  %v653 = vsel %vm547, %v619, 0.0
  %654 = vadd.xlane.f32.xlu0 %v653
  %v655 = vpop.xlane.xlu0 %654
  %v656 = vsel %vm547, %v621, 0.0
  %657 = vadd.xlane.f32.xlu0 %v656
  %v658 = vpop.xlane.xlu0 %657
  %v659 = vsel %vm547, %v623, 0.0
  %660 = vadd.xlane.f32.xlu0 %v659
  %v661 = vpop.xlane.xlu0 %660
  %v662 = vsel %vm547, %v625, 0.0
  %663 = vadd.xlane.f32.xlu0 %v662
  %v664 = vpop.xlane.xlu0 %663
  %v665 = vsel %vm547, %v627, 0.0
  %666 = vadd.xlane.f32.xlu0 %v665
  %v667 = vpop.xlane.xlu0 %666
  %v668 = vsel %vm547, %v629, 0.0
  %669 = vadd.xlane.f32.xlu0 %v668
  %v670 = vpop.xlane.xlu0 %669
  %v671 = vsel %vm547, %v631, 0.0
  %672 = vadd.xlane.f32.xlu0 %v671
  %v673 = vpop.xlane.xlu0 %672
  %v674 = vsel %vm547, %v633, 0.0
  %675 = vadd.xlane.f32.xlu0 %v674
  %v676 = vpop.xlane.xlu0 %675
  %v677 = vsel %vm547, %v635, 0.0
  %678 = vadd.xlane.f32.xlu0 %v677
  %v679 = vpop.xlane.xlu0 %678
  %v680 = vsel %vm547, %v637, 0.0
  %681 = vadd.xlane.f32.xlu0 %v680
  %v682 = vpop.xlane.xlu0 %681
  %v683 = vsel %vm547, %v639, 0.0
  %684 = vadd.xlane.f32.xlu0 %v683
  %v685 = vpop.xlane.xlu0 %684
  %v686 = vsel %vm547, %v641, 0.0
  %687 = vadd.xlane.f32.xlu0 %v686
  %v688 = vpop.xlane.xlu0 %687
  %v689 = vsel %vm547, %v643, 0.0
  %690 = vadd.xlane.f32.xlu0 %v689
  %v691 = vpop.xlane.xlu0 %690
  %v692 = vlog2.pop %v646
  %v693 = vmul.f32 %v692, 0.6931472
  %v694 = vlog2.pop %v649
  %v695 = vmul.f32 %v694, 0.6931472
  %v696 = vlog2.pop %v652
  %v697 = vmul.f32 %v696, 0.6931472
  %v698 = vlog2.pop %v655
  %v699 = vmul.f32 %v698, 0.6931472
  %v700 = vlog2.pop %v658
  %v701 = vmul.f32 %v700, 0.6931472
  %v702 = vlog2.pop %v661
  %v703 = vmul.f32 %v702, 0.6931472
  %v704 = vlog2.pop %v664
  %v705 = vmul.f32 %v704, 0.6931472
  %v706 = vlog2.pop %v667
  %v707 = vmul.f32 %v706, 0.6931472
  %v708 = vlog2.pop %v670
  %v709 = vmul.f32 %v708, 0.6931472
  %v710 = vlog2.pop %v673
  %v711 = vmul.f32 %v710, 0.6931472
  %v712 = vlog2.pop %v676
  %v713 = vmul.f32 %v712, 0.6931472
  %v714 = vlog2.pop %v679
  %v715 = vmul.f32 %v714, 0.6931472
  %v716 = vlog2.pop %v682
  %v717 = vmul.f32 %v716, 0.6931472
  %v718 = vlog2.pop %v685
  %v719 = vmul.f32 %v718, 0.6931472
  %v720 = vlog2.pop %v688
  %v721 = vmul.f32 %v720, 0.6931472
  %v722 = vlog2.pop %v691
  %v723 = vmul.f32 %v722, 0.6931472
  %v724 = vsub.f32 %v596, %v693
  %v725 = vsub.f32 %v597, %v695
  %v726 = vsub.f32 %v598, %v697
  %v727 = vsub.f32 %v599, %v699
  %v728 = vsub.f32 %v600, %v701
  %v729 = vsub.f32 %v601, %v703
  %v730 = vsub.f32 %v602, %v705
  %v731 = vsub.f32 %v603, %v707
  %v732 = vsub.f32 %v604, %v709
  %v733 = vsub.f32 %v605, %v711
  %v734 = vsub.f32 %v606, %v713
  %v735 = vsub.f32 %v607, %v715
  %v736 = vsub.f32 %v608, %v717
  %v737 = vsub.f32 %v609, %v719
  %v738 = vsub.f32 %v610, %v721
  %v739 = vsub.f32 %v611, %v723
  %740 = vst.msk [vmem:[%s6] sm:$0xff] %vm547, %v724
  %741 = vst.msk [vmem:[%s6 + $0x8] sm:$0xff] %vm547, %v725
  %742 = vst.msk [vmem:[%s6 + $0x10] sm:$0xff] %vm547, %v726
  %743 = vst.msk [vmem:[%s6 + $0x18] sm:$0xff] %vm547, %v727
  %744 = vst.msk [vmem:[%s6 + $0x20] sm:$0xff] %vm547, %v728
  %745 = vst.msk [vmem:[%s6 + $0x28] sm:$0xff] %vm547, %v729
  %746 = vst.msk [vmem:[%s6 + $0x30] sm:$0xff] %vm547, %v730
  %747 = vst.msk [vmem:[%s6 + $0x38] sm:$0xff] %vm547, %v731
  %748 = vst.msk [vmem:[%s6 + $0x40] sm:$0xff] %vm547, %v732
  %749 = vst.msk [vmem:[%s6 + $0x48] sm:$0xff] %vm547, %v733
  %750 = vst.msk [vmem:[%s6 + $0x50] sm:$0xff] %vm547, %v734
  %751 = vst.msk [vmem:[%s6 + $0x58] sm:$0xff] %vm547, %v735
  %752 = vst.msk [vmem:[%s6 + $0x60] sm:$0xff] %vm547, %v736
  %753 = vst.msk [vmem:[%s6 + $0x68] sm:$0xff] %vm547, %v737
  %754 = vst.msk [vmem:[%s6 + $0x70] sm:$0xff] %vm547, %v738
  %755 = vst.msk [vmem:[%s6 + $0x78] sm:$0xff] %vm547, %v739
  // Predicated region
  $region26: #{appnp_net_forward.1} parent=0 // pred_check
    _
  $region27: #{appnp_net_forward.1} parent=0 // pred_check_branch
    %757 = sbr.rel (0) target = $region29
  $region28: #{appnp_net_forward.1} parent=0 // pred_region
    _
  $region29: #{appnp_net_forward.1} parent=0 // pred_fallthru
    _
  // Predicated region
  $region30: #{appnp_net_forward.1} parent=0 // pred_check
    _
  $region31: #{appnp_net_forward.1} parent=0 // pred_check_branch
    %759 = sbr.rel (0) target = $region33
  $region32: #{appnp_net_forward.1} parent=0 // pred_region
    _
  $region33: #{appnp_net_forward.1} parent=0 // pred_fallthru
    _

</llo_original>
